<compile_context>
chip_gen: v6e
topology: v6e:2x2x1
jax: 0.10.0
libtpu: 0.0.40
codegen_flags: <defaults>
</compile_context>

<pallas_src>
import functools

import jax
import jax.numpy as jnp
from jax.experimental import pallas as pl
from jax.experimental.pallas import tpu as pltpu

DICT_SIZE = 27      # vocab
INPUT_SIZE = 32     # embedding dim E
HIDDEN_SIZE = 32    # LSTM hidden H
OUT_SIZE = 27       # linear output (hard-coded 27 in the module)
OUT_PAD = 128       # lane-padded output width
LSE_PAD = 32        # lanes used for the log-softmax reduction (27 real + pad)
T_BLOCK_MAX = 1024  # max timesteps per grid step


def lstm_lm_kernel(xproj_ref, whht_ref, wlint_ref, blin_ref, out_ref,
                   carry_ref, hall_ref):
    """One grid step: t_blk recurrence steps + output head + log-softmax.

    xproj_ref : (t_blk, 4H)  precomputed W_ih @ x_t + b (g columns x2)
    whht_ref  : (H, 4H)      W_hh^T (g columns x2)
    wlint_ref : (H, OUT_PAD) W_lin^T, zero-padded columns
    blin_ref  : (1, OUT_PAD) b_lin, pad columns = -1e30
    out_ref   : (t_blk, OUT_PAD) log-probs (valid in first 27 lanes)
    carry_ref : (2, H) persistent VMEM scratch, row 0 = h, row 1 = c
    hall_ref  : (t_blk, H) per-block hidden-state stash
    """
    tblk = xproj_ref.shape[0]
    H = whht_ref.shape[0]

    # Zero the recurrent state only on the first block of the sequence.
    @pl.when(pl.program_id(0) == 0)
    def _():
        carry_ref[...] = jnp.zeros_like(carry_ref)

    w_hh_t = whht_ref[...]                       # (H, 4H), hoisted / invariant

    def step(t, carry):
        h, c = carry                                           # (1, H) each
        gates = xproj_ref[pl.ds(t, 1), :] + jnp.dot(
            h, w_hh_t, preferred_element_type=jnp.float32)     # (1, 4H)
        # Single EUP push over the full 128-lane gate vreg; the g gate uses
        # tanh(x) = 2*sigmoid(2x) - 1 (its pre-activation columns were
        # pre-scaled by 2 in the wrapper), so no second full-width push.
        sig = jax.nn.sigmoid(gates)
        i_g = sig[:, 0 * H:1 * H]
        f_g = sig[:, 1 * H:2 * H]
        g_g = 2.0 * sig[:, 2 * H:3 * H] - 1.0
        o_g = sig[:, 3 * H:4 * H]
        c_new = f_g * c + i_g * g_g
        h_new = o_g * jnp.tanh(c_new)
        # TODO(synk): could coalesce into (8,H) slab stores per unroll group
        # if the bundle shows store-slot pressure (v5e has one vst slot); the
        # stores sit off the serial h->h critical chain, so kept simple.
        hall_ref[pl.ds(t, 1), :] = h_new                       # stash h_t
        return (h_new, c_new)

    h0 = carry_ref[0:1, :]
    c0 = carry_ref[1:2, :]
    h_f, c_f = jax.lax.fori_loop(0, tblk, step, (h0, c0), unroll=8)
    carry_ref[0:1, :] = h_f
    carry_ref[1:2, :] = c_f

    # Output head at lane-padded width + direct, numerically stable
    # log-softmax.  The max/exp/sum reduction only touches the first LSE_PAD
    # lanes (27 real lanes; pad bias -1e30 makes extra lanes contribute 0);
    # the subtract stays full width so the output store stays lane-dense.
    logits = jnp.dot(hall_ref[...], wlint_ref[...],
                     preferred_element_type=jnp.float32) + blin_ref[...]
    z = logits[:, :LSE_PAD]
    m = jnp.max(z, axis=-1, keepdims=True)
    lse = m + jnp.log(jnp.sum(jnp.exp(z - m), axis=-1, keepdims=True))
    out_ref[...] = logits - lse


@functools.partial(jax.jit, static_argnames=("t_block_max",))
def rnn_language_model_forward(tokens, params, *, t_block_max=T_BLOCK_MAX):
    """tokens: (T,) int32.  Returns log-probs (T, 1, 27) float32."""
    T = tokens.shape[0]
    H = HIDDEN_SIZE

    # --- wrapper-side layout plumbing (all cheap, outside the kernel) -------
    b_fused = params["b_ih"] + params["b_hh"]                       # (4H,)
    # Fold embedding into the input projection: gather a (27, 4H) table.
    xproj_table = jnp.dot(params["emb"], params["w_ih"].T,
                          precision=jax.lax.Precision.HIGHEST) + b_fused
    # tanh-via-sigmoid: pre-scale the g-gate pre-activation columns by 2.
    xproj_table = xproj_table.at[:, 2 * H:3 * H].multiply(2.0)
    x_proj = xproj_table[tokens]                                    # (T, 4H)

    w_hh_t = params["w_hh"].T                                       # (H, 4H)
    w_hh_t = w_hh_t.at[:, 2 * H:3 * H].multiply(2.0)
    w_lin_t = jnp.zeros((H, OUT_PAD), jnp.float32).at[:, :OUT_SIZE].set(
        params["w_lin"].T)                                          # (H, 128)
    b_lin = jnp.full((1, OUT_PAD), -1e30, jnp.float32).at[0, :OUT_SIZE].set(
        params["b_lin"])                                            # (1, 128)

    # --- T tiling: near-equal static blocks, each a multiple of 8 sublanes --
    # Tail waste is bounded by 8*n_blocks steps while trip counts stay static
    # (keeps unroll=8 on the recurrence loop).
    n_blocks = pl.cdiv(T, t_block_max)
    t_blk = pl.cdiv(pl.cdiv(T, n_blocks), 8) * 8
    t_pad = n_blocks * t_blk
    if t_pad != T:
        x_proj = jnp.pad(x_proj, ((0, t_pad - T), (0, 0)))

    out = pl.pallas_call(
        lstm_lm_kernel,
        out_shape=jax.ShapeDtypeStruct((t_pad, OUT_PAD), jnp.float32),
        grid=(n_blocks,),
        in_specs=[
            pl.BlockSpec((t_blk, 4 * H), lambda i: (i, 0)),   # x_proj slab
            pl.BlockSpec((H, 4 * H), lambda i: (0, 0)),       # W_hh^T (resident)
            pl.BlockSpec((H, OUT_PAD), lambda i: (0, 0)),     # W_lin^T (resident)
            pl.BlockSpec((1, OUT_PAD), lambda i: (0, 0)),     # b_lin (resident)
        ],
        out_specs=pl.BlockSpec((t_blk, OUT_PAD), lambda i: (i, 0)),
        scratch_shapes=[
            pltpu.VMEM((2, H), jnp.float32),        # (h, c) carry across blocks
            pltpu.VMEM((t_blk, H), jnp.float32),    # per-block hidden states
        ],
        compiler_params=pltpu.CompilerParams(
            dimension_semantics=("arbitrary",),     # serial recurrence over T
            vmem_limit_bytes=32 * 1024 * 1024,
        ),
    )(x_proj, w_hh_t, w_lin_t, b_lin)

    return out[:T, :OUT_SIZE].reshape(T, 1, OUT_SIZE)


def make_params(key):
    """Deterministic parameter init matching the module's shapes."""
    ks = jax.random.split(key, 7)
    bound = 1.0 / jnp.sqrt(HIDDEN_SIZE)
    u = lambda k, shape: jax.random.uniform(k, shape, jnp.float32, -bound, bound)
    return {
        "emb": jax.random.normal(ks[0], (DICT_SIZE, INPUT_SIZE), jnp.float32),
        "w_ih": u(ks[1], (4 * HIDDEN_SIZE, INPUT_SIZE)),
        "w_hh": u(ks[2], (4 * HIDDEN_SIZE, HIDDEN_SIZE)),
        "b_ih": u(ks[3], (4 * HIDDEN_SIZE,)),
        "b_hh": u(ks[4], (4 * HIDDEN_SIZE,)),
        "w_lin": u(ks[5], (OUT_SIZE, HIDDEN_SIZE)),
        "b_lin": u(ks[6], (OUT_SIZE,)),
    }


def reference_forward(tokens, params):
    """Pure-JAX reference reproducing torch LSTM + Linear + log(softmax)."""
    x = params["emb"][tokens]
    H = HIDDEN_SIZE
    b = params["b_ih"] + params["b_hh"]
    hi = jax.lax.Precision.HIGHEST

    def step(carry, xt):
        h, c = carry
        gates = (jnp.dot(params["w_ih"], xt, precision=hi)
                 + jnp.dot(params["w_hh"], h, precision=hi) + b)
        i = jax.nn.sigmoid(gates[0 * H:1 * H])
        f = jax.nn.sigmoid(gates[1 * H:2 * H])
        g = jnp.tanh(gates[2 * H:3 * H])
        o = jax.nn.sigmoid(gates[3 * H:4 * H])
        c = f * c + i * g
        h = o * jnp.tanh(c)
        return (h, c), h

    _, hs = jax.lax.scan(step, (jnp.zeros(H), jnp.zeros(H)), x)
    logits = jnp.dot(hs, params["w_lin"].T, precision=hi) + params["b_lin"]
    return jax.nn.log_softmax(logits, axis=-1).reshape(len(tokens), 1, OUT_SIZE)


if __name__ == "__main__":
    key = jax.random.PRNGKey(0)
    pk, tk = jax.random.split(key)
    params = make_params(pk)

    # Small single-block test (seq=8).
    seq_len = 8
    tokens = jax.random.randint(tk, (seq_len,), 0, DICT_SIZE, dtype=jnp.int32)
    out = rnn_language_model_forward(tokens, params)
    jax.block_until_ready(out)
    ref = reference_forward(tokens, params)
    assert out.shape == (seq_len, 1, OUT_SIZE)
    assert jnp.allclose(out, ref, atol=1e-4, rtol=1e-4), "mismatch vs JAX reference"

    # Multi-block test: exercises the cross-block (h, c) carry and the padded
    # tail (T=40 with 16-step blocks -> 3 blocks, 8 padded tail steps).
    tokens2 = jax.random.randint(jax.random.PRNGKey(1), (40,), 0, DICT_SIZE,
                                 dtype=jnp.int32)
    out2 = rnn_language_model_forward(tokens2, params, t_block_max=16)
    jax.block_until_ready(out2)
    ref2 = reference_forward(tokens2, params)
    assert out2.shape == (40, 1, OUT_SIZE)
    assert jnp.allclose(out2, ref2, atol=5e-4, rtol=5e-4), "mismatch (multi-block)"

    print("KERNEL_OK")
</pallas_src>

<mosaic_0001>
module attributes {stable_mosaic.version = 11 : i64} {
  func.func @lstm_lm_kernel(%arg0: i32, %arg1: memref<8x128xf32, #tpu.memory_space<vmem>>, %arg2: memref<32x128xf32, #tpu.memory_space<vmem>>, %arg3: memref<32x128xf32, #tpu.memory_space<vmem>>, %arg4: memref<1x128xf32, #tpu.memory_space<vmem>>, %arg5: memref<8x128xf32, #tpu.memory_space<vmem>>, %arg6: memref<2x32xf32, #tpu.memory_space<vmem>>, %arg7: memref<8x32xf32, #tpu.memory_space<vmem>>) attributes {dimension_semantics = [#tpu.dimension_semantics<arbitrary>], iteration_bounds = array<i64: 1>, scalar_prefetch = 0 : i64, scratch_operands = 2 : i64, tpu.core_type = #tpu.core_type<tc>, window_params = [{transform_indices = @transform_0, window_bounds = array<i64: 8, 128>}, {pipeline_mode = #tpu.pipeline_mode<synchronous>, transform_indices = @transform_1, window_bounds = array<i64: 32, 128>}, {pipeline_mode = #tpu.pipeline_mode<synchronous>, transform_indices = @transform_2, window_bounds = array<i64: 32, 128>}, {pipeline_mode = #tpu.pipeline_mode<synchronous>, transform_indices = @transform_3, window_bounds = array<i64: 1, 128>}, {transform_indices = @transform_4, window_bounds = array<i64: 8, 128>}]} {
    %c0_i32 = arith.constant 0 : i32
    %0 = arith.cmpi eq, %arg0, %c0_i32 : i32
    %1 = arith.extui %0 : i1 to i32
    %c0_i32_0 = arith.constant 0 : i32
    %2 = arith.cmpi ne, %1, %c0_i32_0 : i32
    scf.if %2 {
      %cst_68 = arith.constant 0.000000e+00 : f32
      %219 = vector.broadcast %cst_68 : f32 to vector<2x32xf32>
      %c0_69 = arith.constant 0 : index
      %c0_70 = arith.constant 0 : index
      %220 = vector.load %arg6[%c0_69, %c0_70] : memref<2x32xf32, #tpu.memory_space<vmem>>, vector<2x32xf32>
      tpu.vector_store %arg6[%c0_69, %c0_70], %219 {strides = array<i32>} : memref<2x32xf32, #tpu.memory_space<vmem>>, vector<2x32xf32>,
    } else {
    }
    %c0 = arith.constant 0 : index
    %c0_1 = arith.constant 0 : index
    %3 = vector.load %arg2[%c0, %c0_1] : memref<32x128xf32, #tpu.memory_space<vmem>>, vector<32x128xf32>
    %c0_2 = arith.constant 0 : index
    %c0_3 = arith.constant 0 : index
    %4 = vector.load %arg6[%c0_2, %c0_3] : memref<2x32xf32, #tpu.memory_space<vmem>>, vector<1x32xf32>
    %c1 = arith.constant 1 : index
    %c0_4 = arith.constant 0 : index
    %5 = vector.load %arg6[%c1, %c0_4] : memref<2x32xf32, #tpu.memory_space<vmem>>, vector<1x32xf32>
    %c0_i32_5 = arith.constant 0 : i32
    %6 = arith.index_cast %c0_i32_5 : i32 to index
    %c0_6 = arith.constant 0 : index
    %7 = vector.load %arg1[%6, %c0_6] : memref<8x128xf32, #tpu.memory_space<vmem>>, vector<1x128xf32>
    %cst = arith.constant dense<0.000000e+00> : vector<1x128xf32>
    %8 = tpu.matmul %4, %3, %cst {dimension_numbers = #tpu.dot_dimension_numbers<[1], [0], [0], [1], [0, 0, 1, 1], [], []>} : vector<1x32xf32>, vector<32x128xf32>, vector<1x128xf32> -> vector<1x128xf32>
    %9 = arith.addf %7, %8 : vector<1x128xf32>
    %10 = arith.negf %9 : vector<1x128xf32>
    %11 = math.exp %10 : vector<1x128xf32>
    %cst_7 = arith.constant 1.000000e+00 : f32
    %12 = vector.broadcast %cst_7 : f32 to vector<1x128xf32>
    %13 = arith.addf %12, %11 : vector<1x128xf32>
    %14 = arith.divf %12, %13 : vector<1x128xf32>
    %15 = vector.extract_strided_slice %14 {offsets = [0, 0], sizes = [1, 32], strides = [1, 1]} : vector<1x128xf32> to vector<1x32xf32>
    %16 = vector.extract_strided_slice %14 {offsets = [0, 32], sizes = [1, 32], strides = [1, 1]} : vector<1x128xf32> to vector<1x32xf32>
    %17 = vector.extract_strided_slice %14 {offsets = [0, 64], sizes = [1, 32], strides = [1, 1]} : vector<1x128xf32> to vector<1x32xf32>
    %cst_8 = arith.constant 2.000000e+00 : f32
    %18 = vector.broadcast %cst_8 : f32 to vector<1x32xf32>
    %19 = arith.mulf %18, %17 : vector<1x32xf32>
    %cst_9 = arith.constant 1.000000e+00 : f32
    %20 = vector.broadcast %cst_9 : f32 to vector<1x32xf32>
    %21 = arith.subf %19, %20 : vector<1x32xf32>
    %22 = vector.extract_strided_slice %14 {offsets = [0, 96], sizes = [1, 32], strides = [1, 1]} : vector<1x128xf32> to vector<1x32xf32>
    %23 = arith.mulf %16, %5 : vector<1x32xf32>
    %24 = arith.mulf %15, %21 : vector<1x32xf32>
    %25 = arith.addf %23, %24 : vector<1x32xf32>
    %26 = math.tanh %25 : vector<1x32xf32>
    %27 = arith.mulf %22, %26 : vector<1x32xf32>
    %28 = arith.index_cast %c0_i32_5 : i32 to index
    %c0_10 = arith.constant 0 : index
    %29 = vector.load %arg7[%28, %c0_10] : memref<8x32xf32, #tpu.memory_space<vmem>>, vector<1x32xf32>
    tpu.vector_store %arg7[%28, %c0_10], %27 {strides = array<i32>} : memref<8x32xf32, #tpu.memory_space<vmem>>, vector<1x32xf32>,
    %c1_i32 = arith.constant 1 : i32
    %30 = arith.index_cast %c1_i32 : i32 to index
    %c0_11 = arith.constant 0 : index
    %31 = vector.load %arg1[%30, %c0_11] : memref<8x128xf32, #tpu.memory_space<vmem>>, vector<1x128xf32>
    %cst_12 = arith.constant dense<0.000000e+00> : vector<1x128xf32>
    %32 = tpu.matmul %27, %3, %cst_12 {dimension_numbers = #tpu.dot_dimension_numbers<[1], [0], [0], [1], [0, 0, 1, 1], [], []>} : vector<1x32xf32>, vector<32x128xf32>, vector<1x128xf32> -> vector<1x128xf32>
    %33 = arith.addf %31, %32 : vector<1x128xf32>
    %34 = arith.negf %33 : vector<1x128xf32>
    %35 = math.exp %34 : vector<1x128xf32>
    %cst_13 = arith.constant 1.000000e+00 : f32
    %36 = vector.broadcast %cst_13 : f32 to vector<1x128xf32>
    %37 = arith.addf %36, %35 : vector<1x128xf32>
    %38 = arith.divf %36, %37 : vector<1x128xf32>
    %39 = vector.extract_strided_slice %38 {offsets = [0, 0], sizes = [1, 32], strides = [1, 1]} : vector<1x128xf32> to vector<1x32xf32>
    %40 = vector.extract_strided_slice %38 {offsets = [0, 32], sizes = [1, 32], strides = [1, 1]} : vector<1x128xf32> to vector<1x32xf32>
    %41 = vector.extract_strided_slice %38 {offsets = [0, 64], sizes = [1, 32], strides = [1, 1]} : vector<1x128xf32> to vector<1x32xf32>
    %cst_14 = arith.constant 2.000000e+00 : f32
    %42 = vector.broadcast %cst_14 : f32 to vector<1x32xf32>
    %43 = arith.mulf %42, %41 : vector<1x32xf32>
    %cst_15 = arith.constant 1.000000e+00 : f32
    %44 = vector.broadcast %cst_15 : f32 to vector<1x32xf32>
    %45 = arith.subf %43, %44 : vector<1x32xf32>
    %46 = vector.extract_strided_slice %38 {offsets = [0, 96], sizes = [1, 32], strides = [1, 1]} : vector<1x128xf32> to vector<1x32xf32>
    %47 = arith.mulf %40, %25 : vector<1x32xf32>
    %48 = arith.mulf %39, %45 : vector<1x32xf32>
    %49 = arith.addf %47, %48 : vector<1x32xf32>
    %50 = math.tanh %49 : vector<1x32xf32>
    %51 = arith.mulf %46, %50 : vector<1x32xf32>
    %52 = arith.index_cast %c1_i32 : i32 to index
    %c0_16 = arith.constant 0 : index
    %53 = vector.load %arg7[%52, %c0_16] : memref<8x32xf32, #tpu.memory_space<vmem>>, vector<1x32xf32>
    tpu.vector_store %arg7[%52, %c0_16], %51 {strides = array<i32>} : memref<8x32xf32, #tpu.memory_space<vmem>>, vector<1x32xf32>,
    %c2_i32 = arith.constant 2 : i32
    %54 = arith.index_cast %c2_i32 : i32 to index
    %c0_17 = arith.constant 0 : index
    %55 = vector.load %arg1[%54, %c0_17] : memref<8x128xf32, #tpu.memory_space<vmem>>, vector<1x128xf32>
    %cst_18 = arith.constant dense<0.000000e+00> : vector<1x128xf32>
    %56 = tpu.matmul %51, %3, %cst_18 {dimension_numbers = #tpu.dot_dimension_numbers<[1], [0], [0], [1], [0, 0, 1, 1], [], []>} : vector<1x32xf32>, vector<32x128xf32>, vector<1x128xf32> -> vector<1x128xf32>
    %57 = arith.addf %55, %56 : vector<1x128xf32>
    %58 = arith.negf %57 : vector<1x128xf32>
    %59 = math.exp %58 : vector<1x128xf32>
    %cst_19 = arith.constant 1.000000e+00 : f32
    %60 = vector.broadcast %cst_19 : f32 to vector<1x128xf32>
    %61 = arith.addf %60, %59 : vector<1x128xf32>
    %62 = arith.divf %60, %61 : vector<1x128xf32>
    %63 = vector.extract_strided_slice %62 {offsets = [0, 0], sizes = [1, 32], strides = [1, 1]} : vector<1x128xf32> to vector<1x32xf32>
    %64 = vector.extract_strided_slice %62 {offsets = [0, 32], sizes = [1, 32], strides = [1, 1]} : vector<1x128xf32> to vector<1x32xf32>
    %65 = vector.extract_strided_slice %62 {offsets = [0, 64], sizes = [1, 32], strides = [1, 1]} : vector<1x128xf32> to vector<1x32xf32>
    %cst_20 = arith.constant 2.000000e+00 : f32
    %66 = vector.broadcast %cst_20 : f32 to vector<1x32xf32>
    %67 = arith.mulf %66, %65 : vector<1x32xf32>
    %cst_21 = arith.constant 1.000000e+00 : f32
    %68 = vector.broadcast %cst_21 : f32 to vector<1x32xf32>
    %69 = arith.subf %67, %68 : vector<1x32xf32>
    %70 = vector.extract_strided_slice %62 {offsets = [0, 96], sizes = [1, 32], strides = [1, 1]} : vector<1x128xf32> to vector<1x32xf32>
    %71 = arith.mulf %64, %49 : vector<1x32xf32>
    %72 = arith.mulf %63, %69 : vector<1x32xf32>
    %73 = arith.addf %71, %72 : vector<1x32xf32>
    %74 = math.tanh %73 : vector<1x32xf32>
    %75 = arith.mulf %70, %74 : vector<1x32xf32>
    %76 = arith.index_cast %c2_i32 : i32 to index
    %c0_22 = arith.constant 0 : index
    %77 = vector.load %arg7[%76, %c0_22] : memref<8x32xf32, #tpu.memory_space<vmem>>, vector<1x32xf32>
    tpu.vector_store %arg7[%76, %c0_22], %75 {strides = array<i32>} : memref<8x32xf32, #tpu.memory_space<vmem>>, vector<1x32xf32>,
    %c3_i32 = arith.constant 3 : i32
    %78 = arith.index_cast %c3_i32 : i32 to index
    %c0_23 = arith.constant 0 : index
    %79 = vector.load %arg1[%78, %c0_23] : memref<8x128xf32, #tpu.memory_space<vmem>>, vector<1x128xf32>
    %cst_24 = arith.constant dense<0.000000e+00> : vector<1x128xf32>
    %80 = tpu.matmul %75, %3, %cst_24 {dimension_numbers = #tpu.dot_dimension_numbers<[1], [0], [0], [1], [0, 0, 1, 1], [], []>} : vector<1x32xf32>, vector<32x128xf32>, vector<1x128xf32> -> vector<1x128xf32>
    %81 = arith.addf %79, %80 : vector<1x128xf32>
    %82 = arith.negf %81 : vector<1x128xf32>
    %83 = math.exp %82 : vector<1x128xf32>
    %cst_25 = arith.constant 1.000000e+00 : f32
    %84 = vector.broadcast %cst_25 : f32 to vector<1x128xf32>
    %85 = arith.addf %84, %83 : vector<1x128xf32>
    %86 = arith.divf %84, %85 : vector<1x128xf32>
    %87 = vector.extract_strided_slice %86 {offsets = [0, 0], sizes = [1, 32], strides = [1, 1]} : vector<1x128xf32> to vector<1x32xf32>
    %88 = vector.extract_strided_slice %86 {offsets = [0, 32], sizes = [1, 32], strides = [1, 1]} : vector<1x128xf32> to vector<1x32xf32>
    %89 = vector.extract_strided_slice %86 {offsets = [0, 64], sizes = [1, 32], strides = [1, 1]} : vector<1x128xf32> to vector<1x32xf32>
    %cst_26 = arith.constant 2.000000e+00 : f32
    %90 = vector.broadcast %cst_26 : f32 to vector<1x32xf32>
    %91 = arith.mulf %90, %89 : vector<1x32xf32>
    %cst_27 = arith.constant 1.000000e+00 : f32
    %92 = vector.broadcast %cst_27 : f32 to vector<1x32xf32>
    %93 = arith.subf %91, %92 : vector<1x32xf32>
    %94 = vector.extract_strided_slice %86 {offsets = [0, 96], sizes = [1, 32], strides = [1, 1]} : vector<1x128xf32> to vector<1x32xf32>
    %95 = arith.mulf %88, %73 : vector<1x32xf32>
    %96 = arith.mulf %87, %93 : vector<1x32xf32>
    %97 = arith.addf %95, %96 : vector<1x32xf32>
    %98 = math.tanh %97 : vector<1x32xf32>
    %99 = arith.mulf %94, %98 : vector<1x32xf32>
    %100 = arith.index_cast %c3_i32 : i32 to index
    %c0_28 = arith.constant 0 : index
    %101 = vector.load %arg7[%100, %c0_28] : memref<8x32xf32, #tpu.memory_space<vmem>>, vector<1x32xf32>
    tpu.vector_store %arg7[%100, %c0_28], %99 {strides = array<i32>} : memref<8x32xf32, #tpu.memory_space<vmem>>, vector<1x32xf32>,
    %c4_i32 = arith.constant 4 : i32
    %102 = arith.index_cast %c4_i32 : i32 to index
    %c0_29 = arith.constant 0 : index
    %103 = vector.load %arg1[%102, %c0_29] : memref<8x128xf32, #tpu.memory_space<vmem>>, vector<1x128xf32>
    %cst_30 = arith.constant dense<0.000000e+00> : vector<1x128xf32>
    %104 = tpu.matmul %99, %3, %cst_30 {dimension_numbers = #tpu.dot_dimension_numbers<[1], [0], [0], [1], [0, 0, 1, 1], [], []>} : vector<1x32xf32>, vector<32x128xf32>, vector<1x128xf32> -> vector<1x128xf32>
    %105 = arith.addf %103, %104 : vector<1x128xf32>
    %106 = arith.negf %105 : vector<1x128xf32>
    %107 = math.exp %106 : vector<1x128xf32>
    %cst_31 = arith.constant 1.000000e+00 : f32
    %108 = vector.broadcast %cst_31 : f32 to vector<1x128xf32>
    %109 = arith.addf %108, %107 : vector<1x128xf32>
    %110 = arith.divf %108, %109 : vector<1x128xf32>
    %111 = vector.extract_strided_slice %110 {offsets = [0, 0], sizes = [1, 32], strides = [1, 1]} : vector<1x128xf32> to vector<1x32xf32>
    %112 = vector.extract_strided_slice %110 {offsets = [0, 32], sizes = [1, 32], strides = [1, 1]} : vector<1x128xf32> to vector<1x32xf32>
    %113 = vector.extract_strided_slice %110 {offsets = [0, 64], sizes = [1, 32], strides = [1, 1]} : vector<1x128xf32> to vector<1x32xf32>
    %cst_32 = arith.constant 2.000000e+00 : f32
    %114 = vector.broadcast %cst_32 : f32 to vector<1x32xf32>
    %115 = arith.mulf %114, %113 : vector<1x32xf32>
    %cst_33 = arith.constant 1.000000e+00 : f32
    %116 = vector.broadcast %cst_33 : f32 to vector<1x32xf32>
    %117 = arith.subf %115, %116 : vector<1x32xf32>
    %118 = vector.extract_strided_slice %110 {offsets = [0, 96], sizes = [1, 32], strides = [1, 1]} : vector<1x128xf32> to vector<1x32xf32>
    %119 = arith.mulf %112, %97 : vector<1x32xf32>
    %120 = arith.mulf %111, %117 : vector<1x32xf32>
    %121 = arith.addf %119, %120 : vector<1x32xf32>
    %122 = math.tanh %121 : vector<1x32xf32>
    %123 = arith.mulf %118, %122 : vector<1x32xf32>
    %124 = arith.index_cast %c4_i32 : i32 to index
    %c0_34 = arith.constant 0 : index
    %125 = vector.load %arg7[%124, %c0_34] : memref<8x32xf32, #tpu.memory_space<vmem>>, vector<1x32xf32>
    tpu.vector_store %arg7[%124, %c0_34], %123 {strides = array<i32>} : memref<8x32xf32, #tpu.memory_space<vmem>>, vector<1x32xf32>,
    %c5_i32 = arith.constant 5 : i32
    %126 = arith.index_cast %c5_i32 : i32 to index
    %c0_35 = arith.constant 0 : index
    %127 = vector.load %arg1[%126, %c0_35] : memref<8x128xf32, #tpu.memory_space<vmem>>, vector<1x128xf32>
    %cst_36 = arith.constant dense<0.000000e+00> : vector<1x128xf32>
    %128 = tpu.matmul %123, %3, %cst_36 {dimension_numbers = #tpu.dot_dimension_numbers<[1], [0], [0], [1], [0, 0, 1, 1], [], []>} : vector<1x32xf32>, vector<32x128xf32>, vector<1x128xf32> -> vector<1x128xf32>
    %129 = arith.addf %127, %128 : vector<1x128xf32>
    %130 = arith.negf %129 : vector<1x128xf32>
    %131 = math.exp %130 : vector<1x128xf32>
    %cst_37 = arith.constant 1.000000e+00 : f32
    %132 = vector.broadcast %cst_37 : f32 to vector<1x128xf32>
    %133 = arith.addf %132, %131 : vector<1x128xf32>
    %134 = arith.divf %132, %133 : vector<1x128xf32>
    %135 = vector.extract_strided_slice %134 {offsets = [0, 0], sizes = [1, 32], strides = [1, 1]} : vector<1x128xf32> to vector<1x32xf32>
    %136 = vector.extract_strided_slice %134 {offsets = [0, 32], sizes = [1, 32], strides = [1, 1]} : vector<1x128xf32> to vector<1x32xf32>
    %137 = vector.extract_strided_slice %134 {offsets = [0, 64], sizes = [1, 32], strides = [1, 1]} : vector<1x128xf32> to vector<1x32xf32>
    %cst_38 = arith.constant 2.000000e+00 : f32
    %138 = vector.broadcast %cst_38 : f32 to vector<1x32xf32>
    %139 = arith.mulf %138, %137 : vector<1x32xf32>
    %cst_39 = arith.constant 1.000000e+00 : f32
    %140 = vector.broadcast %cst_39 : f32 to vector<1x32xf32>
    %141 = arith.subf %139, %140 : vector<1x32xf32>
    %142 = vector.extract_strided_slice %134 {offsets = [0, 96], sizes = [1, 32], strides = [1, 1]} : vector<1x128xf32> to vector<1x32xf32>
    %143 = arith.mulf %136, %121 : vector<1x32xf32>
    %144 = arith.mulf %135, %141 : vector<1x32xf32>
    %145 = arith.addf %143, %144 : vector<1x32xf32>
    %146 = math.tanh %145 : vector<1x32xf32>
    %147 = arith.mulf %142, %146 : vector<1x32xf32>
    %148 = arith.index_cast %c5_i32 : i32 to index
    %c0_40 = arith.constant 0 : index
    %149 = vector.load %arg7[%148, %c0_40] : memref<8x32xf32, #tpu.memory_space<vmem>>, vector<1x32xf32>
    tpu.vector_store %arg7[%148, %c0_40], %147 {strides = array<i32>} : memref<8x32xf32, #tpu.memory_space<vmem>>, vector<1x32xf32>,
    %c6_i32 = arith.constant 6 : i32
    %150 = arith.index_cast %c6_i32 : i32 to index
    %c0_41 = arith.constant 0 : index
    %151 = vector.load %arg1[%150, %c0_41] : memref<8x128xf32, #tpu.memory_space<vmem>>, vector<1x128xf32>
    %cst_42 = arith.constant dense<0.000000e+00> : vector<1x128xf32>
    %152 = tpu.matmul %147, %3, %cst_42 {dimension_numbers = #tpu.dot_dimension_numbers<[1], [0], [0], [1], [0, 0, 1, 1], [], []>} : vector<1x32xf32>, vector<32x128xf32>, vector<1x128xf32> -> vector<1x128xf32>
    %153 = arith.addf %151, %152 : vector<1x128xf32>
    %154 = arith.negf %153 : vector<1x128xf32>
    %155 = math.exp %154 : vector<1x128xf32>
    %cst_43 = arith.constant 1.000000e+00 : f32
    %156 = vector.broadcast %cst_43 : f32 to vector<1x128xf32>
    %157 = arith.addf %156, %155 : vector<1x128xf32>
    %158 = arith.divf %156, %157 : vector<1x128xf32>
    %159 = vector.extract_strided_slice %158 {offsets = [0, 0], sizes = [1, 32], strides = [1, 1]} : vector<1x128xf32> to vector<1x32xf32>
    %160 = vector.extract_strided_slice %158 {offsets = [0, 32], sizes = [1, 32], strides = [1, 1]} : vector<1x128xf32> to vector<1x32xf32>
    %161 = vector.extract_strided_slice %158 {offsets = [0, 64], sizes = [1, 32], strides = [1, 1]} : vector<1x128xf32> to vector<1x32xf32>
    %cst_44 = arith.constant 2.000000e+00 : f32
    %162 = vector.broadcast %cst_44 : f32 to vector<1x32xf32>
    %163 = arith.mulf %162, %161 : vector<1x32xf32>
    %cst_45 = arith.constant 1.000000e+00 : f32
    %164 = vector.broadcast %cst_45 : f32 to vector<1x32xf32>
    %165 = arith.subf %163, %164 : vector<1x32xf32>
    %166 = vector.extract_strided_slice %158 {offsets = [0, 96], sizes = [1, 32], strides = [1, 1]} : vector<1x128xf32> to vector<1x32xf32>
    %167 = arith.mulf %160, %145 : vector<1x32xf32>
    %168 = arith.mulf %159, %165 : vector<1x32xf32>
    %169 = arith.addf %167, %168 : vector<1x32xf32>
    %170 = math.tanh %169 : vector<1x32xf32>
    %171 = arith.mulf %166, %170 : vector<1x32xf32>
    %172 = arith.index_cast %c6_i32 : i32 to index
    %c0_46 = arith.constant 0 : index
    %173 = vector.load %arg7[%172, %c0_46] : memref<8x32xf32, #tpu.memory_space<vmem>>, vector<1x32xf32>
    tpu.vector_store %arg7[%172, %c0_46], %171 {strides = array<i32>} : memref<8x32xf32, #tpu.memory_space<vmem>>, vector<1x32xf32>,
    %c7_i32 = arith.constant 7 : i32
    %174 = arith.index_cast %c7_i32 : i32 to index
    %c0_47 = arith.constant 0 : index
    %175 = vector.load %arg1[%174, %c0_47] : memref<8x128xf32, #tpu.memory_space<vmem>>, vector<1x128xf32>
    %cst_48 = arith.constant dense<0.000000e+00> : vector<1x128xf32>
    %176 = tpu.matmul %171, %3, %cst_48 {dimension_numbers = #tpu.dot_dimension_numbers<[1], [0], [0], [1], [0, 0, 1, 1], [], []>} : vector<1x32xf32>, vector<32x128xf32>, vector<1x128xf32> -> vector<1x128xf32>
    %177 = arith.addf %175, %176 : vector<1x128xf32>
    %178 = arith.negf %177 : vector<1x128xf32>
    %179 = math.exp %178 : vector<1x128xf32>
    %cst_49 = arith.constant 1.000000e+00 : f32
    %180 = vector.broadcast %cst_49 : f32 to vector<1x128xf32>
    %181 = arith.addf %180, %179 : vector<1x128xf32>
    %182 = arith.divf %180, %181 : vector<1x128xf32>
    %183 = vector.extract_strided_slice %182 {offsets = [0, 0], sizes = [1, 32], strides = [1, 1]} : vector<1x128xf32> to vector<1x32xf32>
    %184 = vector.extract_strided_slice %182 {offsets = [0, 32], sizes = [1, 32], strides = [1, 1]} : vector<1x128xf32> to vector<1x32xf32>
    %185 = vector.extract_strided_slice %182 {offsets = [0, 64], sizes = [1, 32], strides = [1, 1]} : vector<1x128xf32> to vector<1x32xf32>
    %cst_50 = arith.constant 2.000000e+00 : f32
    %186 = vector.broadcast %cst_50 : f32 to vector<1x32xf32>
    %187 = arith.mulf %186, %185 : vector<1x32xf32>
    %cst_51 = arith.constant 1.000000e+00 : f32
    %188 = vector.broadcast %cst_51 : f32 to vector<1x32xf32>
    %189 = arith.subf %187, %188 : vector<1x32xf32>
    %190 = vector.extract_strided_slice %182 {offsets = [0, 96], sizes = [1, 32], strides = [1, 1]} : vector<1x128xf32> to vector<1x32xf32>
    %191 = arith.mulf %184, %169 : vector<1x32xf32>
    %192 = arith.mulf %183, %189 : vector<1x32xf32>
    %193 = arith.addf %191, %192 : vector<1x32xf32>
    %194 = math.tanh %193 : vector<1x32xf32>
    %195 = arith.mulf %190, %194 : vector<1x32xf32>
    %196 = arith.index_cast %c7_i32 : i32 to index
    %c0_52 = arith.constant 0 : index
    %197 = vector.load %arg7[%196, %c0_52] : memref<8x32xf32, #tpu.memory_space<vmem>>, vector<1x32xf32>
    tpu.vector_store %arg7[%196, %c0_52], %195 {strides = array<i32>} : memref<8x32xf32, #tpu.memory_space<vmem>>, vector<1x32xf32>,
    %c8_i32 = arith.constant 8 : i32
    %c0_53 = arith.constant 0 : index
    %c0_54 = arith.constant 0 : index
    %198 = vector.load %arg6[%c0_53, %c0_54] : memref<2x32xf32, #tpu.memory_space<vmem>>, vector<1x32xf32>
    tpu.vector_store %arg6[%c0_53, %c0_54], %195 {strides = array<i32>} : memref<2x32xf32, #tpu.memory_space<vmem>>, vector<1x32xf32>,
    %c1_55 = arith.constant 1 : index
    %c0_56 = arith.constant 0 : index
    %199 = vector.load %arg6[%c1_55, %c0_56] : memref<2x32xf32, #tpu.memory_space<vmem>>, vector<1x32xf32>
    tpu.vector_store %arg6[%c1_55, %c0_56], %193 {strides = array<i32>} : memref<2x32xf32, #tpu.memory_space<vmem>>, vector<1x32xf32>,
    %c0_57 = arith.constant 0 : index
    %c0_58 = arith.constant 0 : index
    %200 = vector.load %arg7[%c0_57, %c0_58] : memref<8x32xf32, #tpu.memory_space<vmem>>, vector<8x32xf32>
    %c0_59 = arith.constant 0 : index
    %c0_60 = arith.constant 0 : index
    %201 = vector.load %arg3[%c0_59, %c0_60] : memref<32x128xf32, #tpu.memory_space<vmem>>, vector<32x128xf32>
    %cst_61 = arith.constant dense<0.000000e+00> : vector<8x128xf32>
    %202 = tpu.matmul %200, %201, %cst_61 {dimension_numbers = #tpu.dot_dimension_numbers<[1], [0], [0], [1], [0, 0, 1, 1], [], []>} : vector<8x32xf32>, vector<32x128xf32>, vector<8x128xf32> -> vector<8x128xf32>
    %c0_62 = arith.constant 0 : index
    %c0_63 = arith.constant 0 : index
    %203 = vector.load %arg4[%c0_62, %c0_63] : memref<1x128xf32, #tpu.memory_space<vmem>>, vector<1x128xf32>
    %204 = vector.broadcast %203 : vector<1x128xf32> to vector<8x128xf32>
    %205 = arith.addf %202, %204 : vector<8x128xf32>
    %206 = vector.extract_strided_slice %205 {offsets = [0, 0], sizes = [8, 32], strides = [1, 1]} : vector<8x128xf32> to vector<8x32xf32>
    %cst_64 = arith.constant dense<0xFF800000> : vector<8xf32>
    %207 = vector.multi_reduction <maximumf>, %206, %cst_64 [1] : vector<8x32xf32> to vector<8xf32>
    %208 = vector.shape_cast %207 : vector<8xf32> to vector<8x1xf32>
    %209 = vector.broadcast %208 : vector<8x1xf32> to vector<8x32xf32>
    %210 = arith.subf %206, %209 : vector<8x32xf32>
    %211 = math.exp %210 : vector<8x32xf32>
    %cst_65 = arith.constant dense<0.000000e+00> : vector<8xf32>
    %212 = vector.multi_reduction <add>, %211, %cst_65 [1] : vector<8x32xf32> to vector<8xf32>
    %213 = vector.shape_cast %212 : vector<8xf32> to vector<8x1xf32>
    %214 = math.log %213 : vector<8x1xf32>
    %215 = arith.addf %208, %214 : vector<8x1xf32>
    %216 = vector.broadcast %215 : vector<8x1xf32> to vector<8x128xf32>
    %217 = arith.subf %205, %216 : vector<8x128xf32>
    %c0_66 = arith.constant 0 : index
    %c0_67 = arith.constant 0 : index
    %218 = vector.load %arg5[%c0_66, %c0_67] : memref<8x128xf32, #tpu.memory_space<vmem>>, vector<8x128xf32>
    tpu.vector_store %arg5[%c0_66, %c0_67], %217 {strides = array<i32>} : memref<8x128xf32, #tpu.memory_space<vmem>>, vector<8x128xf32>,
    return
  }
  func.func @transform_0(%arg0: i32) -> (i32, i32) {
    %c0_i32 = arith.constant 0 : i32
    %c0_i32_0 = arith.constant 0 : i32
    return %arg0, %c0_i32 : i32, i32
  }
  func.func @transform_1(%arg0: i32) -> (i32, i32) {
    %c0_i32 = arith.constant 0 : i32
    %c0_i32_0 = arith.constant 0 : i32
    %c0_i32_1 = arith.constant 0 : i32
    return %c0_i32, %c0_i32_0 : i32, i32
  }
  func.func @transform_2(%arg0: i32) -> (i32, i32) {
    %c0_i32 = arith.constant 0 : i32
    %c0_i32_0 = arith.constant 0 : i32
    %c0_i32_1 = arith.constant 0 : i32
    return %c0_i32, %c0_i32_0 : i32, i32
  }
  func.func @transform_3(%arg0: i32) -> (i32, i32) {
    %c0_i32 = arith.constant 0 : i32
    %c0_i32_0 = arith.constant 0 : i32
    %c0_i32_1 = arith.constant 0 : i32
    return %c0_i32, %c0_i32_0 : i32, i32
  }
  func.func @transform_4(%arg0: i32) -> (i32, i32) {
    %c0_i32 = arith.constant 0 : i32
    %c0_i32_0 = arith.constant 0 : i32
    return %arg0, %c0_i32 : i32, i32
  }
}

</mosaic_0001>

<llo_original>
// kernel: rnn_language_model_forward.1
$region0: #{rnn_language_model_forward.1}
  #allocation0 [shape = 'u32[]', space=smem, size = 0x4, offset = 0x4, fixed_abs, tag = 'smem constant byte address 0x4 - core index']
  #allocation1 [shape = 'u32[144,128]{1,0:T(1,128)}', space=vmem, size = 0x12000, scoped, tag = 'internal scratch']
  #allocation2 [shape = 'f32[2,32]{1,0:T(2,128)}', space=vmem, size = 0x400, scoped, tag = 'scratch operand']
  #allocation3 [shape = 'f32[8,32]{1,0:T(8,128)}', space=vmem, size = 0x1000, scoped, tag = 'scratch operand']
  %s0 = inlined_call_operand.vmem [shape: f32[8,128], index: 0, kind: input, shape index: {}]
  %s1 = inlined_call_operand.vmem [shape: f32[32,128], index: 1, kind: input, shape index: {}]
  %s2 = inlined_call_operand.vmem [shape: f32[32,128], index: 2, kind: input, shape index: {}]
  %s3 = inlined_call_operand.vmem [shape: f32[1,128], index: 3, kind: input, shape index: {}]
  %s4 = inlined_call_operand.hbm [shape: f32[8,128], index: 4, kind: output, shape index: {}]
  %s5 = sld [smem:[#allocation0]]
  $region30: #{rnn_language_model_forward.1} parent=0
    _
  %s7 = ssub.s32 1, %s5
  %s8 = scalar_select 0, %s7, %s5
  $region1: #{rnn_language_model_forward.1} parent=0
    #allocation4 [shape = 'u8[4096]{0}', space=vmem, size = 0x1000, scoped, tag = 'output window, operand 0, single buffered']
    #allocation5 [shape = 's32[1]{0}', space=sflag, size = 0x4, scoped, tag = 'scoped memory for rnn_language_model_forward.1']
    %9 = vsyncpa [#allocation5], 0
    // Predicated region
    $region2: #{rnn_language_model_forward.1} parent=1 // pred_check
      _
    $region3: #{rnn_language_model_forward.1} parent=1 // pred_check_branch
      %11 = sbr.rel (0) target = $region5
    $region4: #{rnn_language_model_forward.1} parent=1 // pred_region
      _
    $region5: #{rnn_language_model_forward.1} parent=1 // pred_fallthru
      _
    // Predicated region
    $region6: #{rnn_language_model_forward.1} parent=1 // pred_check
      _
    $region7: #{rnn_language_model_forward.1} parent=1 // pred_check_branch
      %13 = sbr.rel (0) target = $region9
    $region8: #{rnn_language_model_forward.1} parent=1 // pred_region
      _
    $region9: #{rnn_language_model_forward.1} parent=1 // pred_fallthru
      _
    // Predicated region
    $region10: #{rnn_language_model_forward.1} parent=1 // pred_check
      _
    $region11: #{rnn_language_model_forward.1} parent=1 // pred_check_branch
      %15 = sbr.rel (0) target = $region13
    $region12: #{rnn_language_model_forward.1} parent=1 // pred_region
      _
    $region13: #{rnn_language_model_forward.1} parent=1 // pred_fallthru
      _
    // Predicated region
    $region14: #{rnn_language_model_forward.1} parent=1 // pred_check
      _
    $region15: #{rnn_language_model_forward.1} parent=1 // pred_check_branch
      %17 = sbr.rel (0) target = $region17
    $region16: #{rnn_language_model_forward.1} parent=1 // pred_region
      _
    $region17: #{rnn_language_model_forward.1} parent=1 // pred_fallthru
      _
    %p18 = scmp.eq.s32.totalorder 0, 0
    // Predicated region
    $region18: #{rnn_language_model_forward.1} parent=1 // pred_check
      %p19 = pneg %p18
    $region19: #{rnn_language_model_forward.1} parent=1 // pred_check_branch
      %21 = sbr.rel (%p19) target = $region21
    $region20: #{rnn_language_model_forward.1} parent=1 // pred_region
      %vm22 = vcmask 254976
      %23 = vst.msk [vmem:[#allocation2] sm:$0x3] %vm22, 0.0
    $region21: #{rnn_language_model_forward.1} parent=1 // pred_fallthru
      _
    %v24 = vld [vmem:[%s1] sm:$0xff]
    %v25 = vld [vmem:[%s1 + $0x8] sm:$0xff]
    %v26 = vld [vmem:[%s1 + $0x10] sm:$0xff]
    %v27 = vld [vmem:[%s1 + $0x18] sm:$0xff]
    %v28 = vld [vmem:[#allocation2] sm:$0x1]
    %v29 = vld [vmem:[#allocation2 + $0x1] sm:$0x1]
    %v30 = vld [vmem:[%s0] sm:$0x1]
    %vm31 = vcmask 261120
    %v33 = vsel %vm31, %v28, 0
    %35 = vmatprep.subr.mxu0 0.0
    %36 = vmatpush1.msra.mxu0 0.0
    %37 = vmatprep.subr.mxu0 0.0
    %38 = vmatpush1.msra.mxu0 0.0
    %39 = vmatprep.subr.mxu0 0.0
    %40 = vmatpush1.msra.mxu0 0.0
    %41 = vmatprep.subr.mxu0 0.0
    %42 = vmatpush1.msra.mxu0 0.0
    %43 = vmatprep.subr.mxu0 0.0
    %44 = vmatpush1.msra.mxu0 0.0
    %45 = vmatprep.subr.mxu0 0.0
    %46 = vmatpush1.msra.mxu0 0.0
    %47 = vmatprep.subr.mxu0 0.0
    %48 = vmatpush1.msra.mxu0 0.0
    %49 = vmatprep.subr.mxu0 0.0
    %50 = vmatpush1.msra.mxu0 0.0
    %51 = vmatprep.subr.mxu0 0.0
    %52 = vmatpush1.msra.mxu0 0.0
    %53 = vmatprep.subr.mxu0 0.0
    %54 = vmatpush1.msra.mxu0 0.0
    %55 = vmatprep.subr.mxu0 0.0
    %56 = vmatpush1.msra.mxu0 0.0
    %57 = vmatprep.subr.mxu0 0.0
    %58 = vmatpush1.msra.mxu0 0.0
    %59 = vmatprep.subr.mxu0 0.0
    %60 = vmatpush1.msra.mxu0 %v27
    %61 = vmatprep.subr.mxu0 0.0
    %62 = vmatpush1.msra.mxu0 %v26
    %63 = vmatprep.subr.mxu0 0.0
    %64 = vmatpush1.msra.mxu0 %v25
    %65 = vmatprep.subr.mxu0 0.0
    %66 = vmatpush1.msra.mxu0 %v24
    %67 = vmatprep.subr.mxu0 0.0
    %68 = vmatpush2.msra.mxu0 0.0
    %69 = vmatprep.subr.mxu0 0.0
    %70 = vmatpush2.msra.mxu0 0.0
    %71 = vmatprep.subr.mxu0 0.0
    %72 = vmatpush2.msra.mxu0 0.0
    %73 = vmatprep.subr.mxu0 0.0
    %74 = vmatpush2.msra.mxu0 0.0
    %75 = vmatprep.subr.mxu0 0.0
    %76 = vmatpush2.msra.mxu0 0.0
    %77 = vmatprep.subr.mxu0 0.0
    %78 = vmatpush2.msra.mxu0 0.0
    %79 = vmatprep.subr.mxu0 0.0
    %80 = vmatpush2.msra.mxu0 0.0
    %81 = vmatprep.subr.mxu0 0.0
    %82 = vmatpush2.msra.mxu0 0.0
    %83 = vmatprep.subr.mxu0 0.0
    %84 = vmatpush2.msra.mxu0 0.0
    %85 = vmatprep.subr.mxu0 0.0
    %86 = vmatpush2.msra.mxu0 0.0
    %87 = vmatprep.subr.mxu0 0.0
    %88 = vmatpush2.msra.mxu0 0.0
    %89 = vmatprep.subr.mxu0 0.0
    %90 = vmatpush2.msra.mxu0 0.0
    %91 = vmatprep.subr.mxu0 0.0
    %92 = vmatpush2.msra.mxu0 0.0
    %93 = vmatprep.subr.mxu0 0.0
    %94 = vmatpush2.msra.mxu0 0.0
    %95 = vmatprep.subr.mxu0 0.0
    %96 = vmatpush2.msra.mxu0 0.0
    %97 = vmatprep.subr.mxu0 0.0
    %98 = vmatpush2.msra.mxu0 0.0
    %99 = vmatprep.mubr.f32.mxu0 0.0
    %100 = vmatmul.mubr.f32.gmra.mxu0 %v33
    %v101 = vpop.f32.mrf.mxu0
    %v102 = vadd.f32 0.0, %v101
    %v103 = vpop.f32.mrf.mxu0
    %104 = vdwg.mxu0
    %v105 = vadd.f32 %v30, %v102
    %v106 = vxor.u32 %v105, 2147483648
    %v107 = vmul.f32 %v106, 1.442695
    %v108 = vpow.pop %v107
    %v109 = vadd.f32 %v108, 1.0
    %v110 = vrcp.pop %v109
    %v111 = vmul.f32 1.0, %v110
    %v112 = vmul.f32 %v111, 2.0
    %v113 = vsub.f32 %v112, 1.0
    %115 = vrot.lane.b32.xlu0 %v29, 32
    %v116 = vpop.permute.xlu0 %115
    %v118 = vmul.f32 %v111, %v116
    %120 = vrot.lane.b32.xlu0 %v113, 64
    %v121 = vpop.permute.xlu0 %120
    %v123 = vmul.f32 %v111, %v121
    %125 = vrot.lane.b32.xlu0 %v123, 32
    %v126 = vpop.permute.xlu0 %125
    %v128 = vadd.f32 %v118, %v126
    %v129 = vtanh.pop %v128
    %131 = vrot.lane.b32.xlu0 %v129, 64
    %v132 = vpop.permute.xlu0 %131
    %v134 = vmul.f32 %v111, %v132
    %136 = vrot.lane.b32.xlu0 %v134, 32
    %v137 = vpop.permute.xlu0 %136
    %vm139 = vcmask 253952
    %140 = vst.msk [vmem:[#allocation3] sm:$0x1] %vm139, %v137
    %v141 = vld [vmem:[%s0 + $0x1] sm:$0x1]
    %v142 = vsel %vm31, %v137, 0
    %144 = vmatprep.subr.mxu0 0.0
    %145 = vmatpush1.msra.mxu0 0.0
    %146 = vmatprep.subr.mxu0 0.0
    %147 = vmatpush1.msra.mxu0 0.0
    %148 = vmatprep.subr.mxu0 0.0
    %149 = vmatpush1.msra.mxu0 0.0
    %150 = vmatprep.subr.mxu0 0.0
    %151 = vmatpush1.msra.mxu0 0.0
    %152 = vmatprep.subr.mxu0 0.0
    %153 = vmatpush1.msra.mxu0 0.0
    %154 = vmatprep.subr.mxu0 0.0
    %155 = vmatpush1.msra.mxu0 0.0
    %156 = vmatprep.subr.mxu0 0.0
    %157 = vmatpush1.msra.mxu0 0.0
    %158 = vmatprep.subr.mxu0 0.0
    %159 = vmatpush1.msra.mxu0 0.0
    %160 = vmatprep.subr.mxu0 0.0
    %161 = vmatpush1.msra.mxu0 0.0
    %162 = vmatprep.subr.mxu0 0.0
    %163 = vmatpush1.msra.mxu0 0.0
    %164 = vmatprep.subr.mxu0 0.0
    %165 = vmatpush1.msra.mxu0 0.0
    %166 = vmatprep.subr.mxu0 0.0
    %167 = vmatpush1.msra.mxu0 0.0
    %168 = vmatprep.subr.mxu0 0.0
    %169 = vmatpush1.msra.mxu0 %v27
    %170 = vmatprep.subr.mxu0 0.0
    %171 = vmatpush1.msra.mxu0 %v26
    %172 = vmatprep.subr.mxu0 0.0
    %173 = vmatpush1.msra.mxu0 %v25
    %174 = vmatprep.subr.mxu0 0.0
    %175 = vmatpush1.msra.mxu0 %v24
    %176 = vmatprep.subr.mxu0 0.0
    %177 = vmatpush2.msra.mxu0 0.0
    %178 = vmatprep.subr.mxu0 0.0
    %179 = vmatpush2.msra.mxu0 0.0
    %180 = vmatprep.subr.mxu0 0.0
    %181 = vmatpush2.msra.mxu0 0.0
    %182 = vmatprep.subr.mxu0 0.0
    %183 = vmatpush2.msra.mxu0 0.0
    %184 = vmatprep.subr.mxu0 0.0
    %185 = vmatpush2.msra.mxu0 0.0
    %186 = vmatprep.subr.mxu0 0.0
    %187 = vmatpush2.msra.mxu0 0.0
    %188 = vmatprep.subr.mxu0 0.0
    %189 = vmatpush2.msra.mxu0 0.0
    %190 = vmatprep.subr.mxu0 0.0
    %191 = vmatpush2.msra.mxu0 0.0
    %192 = vmatprep.subr.mxu0 0.0
    %193 = vmatpush2.msra.mxu0 0.0
    %194 = vmatprep.subr.mxu0 0.0
    %195 = vmatpush2.msra.mxu0 0.0
    %196 = vmatprep.subr.mxu0 0.0
    %197 = vmatpush2.msra.mxu0 0.0
    %198 = vmatprep.subr.mxu0 0.0
    %199 = vmatpush2.msra.mxu0 0.0
    %200 = vmatprep.subr.mxu0 0.0
    %201 = vmatpush2.msra.mxu0 0.0
    %202 = vmatprep.subr.mxu0 0.0
    %203 = vmatpush2.msra.mxu0 0.0
    %204 = vmatprep.subr.mxu0 0.0
    %205 = vmatpush2.msra.mxu0 0.0
    %206 = vmatprep.subr.mxu0 0.0
    %207 = vmatpush2.msra.mxu0 0.0
    %208 = vmatprep.mubr.f32.mxu0 0.0
    %209 = vmatmul.mubr.f32.gmra.mxu0 %v142
    %v210 = vpop.f32.mrf.mxu0
    %v211 = vadd.f32 0.0, %v210
    %v212 = vpop.f32.mrf.mxu0
    %213 = vdwg.mxu0
    %v214 = vadd.f32 %v141, %v211
    %v215 = vxor.u32 %v214, 2147483648
    %v216 = vmul.f32 %v215, 1.442695
    %v217 = vpow.pop %v216
    %v218 = vadd.f32 %v217, 1.0
    %v219 = vrcp.pop %v218
    %v220 = vmul.f32 1.0, %v219
    %v221 = vmul.f32 %v220, 2.0
    %v222 = vsub.f32 %v221, 1.0
    %v223 = vmul.f32 %v220, %v128
    %225 = vrot.lane.b32.xlu0 %v222, 64
    %v226 = vpop.permute.xlu0 %225
    %v228 = vmul.f32 %v220, %v226
    %230 = vrot.lane.b32.xlu0 %v228, 32
    %v231 = vpop.permute.xlu0 %230
    %v233 = vadd.f32 %v223, %v231
    %v234 = vtanh.pop %v233
    %236 = vrot.lane.b32.xlu0 %v234, 64
    %v237 = vpop.permute.xlu0 %236
    %v239 = vmul.f32 %v220, %v237
    %241 = vrot.lane.b32.xlu0 %v239, 32
    %v242 = vpop.permute.xlu0 %241
    %244 = vst.msk [vmem:[#allocation3 + $0x1] sm:$0x1] %vm139, %v242
    %v245 = vld [vmem:[%s0 + $0x2] sm:$0x1]
    %v246 = vsel %vm31, %v242, 0
    %248 = vmatprep.subr.mxu0 0.0
    %249 = vmatpush1.msra.mxu0 0.0
    %250 = vmatprep.subr.mxu0 0.0
    %251 = vmatpush1.msra.mxu0 0.0
    %252 = vmatprep.subr.mxu0 0.0
    %253 = vmatpush1.msra.mxu0 0.0
    %254 = vmatprep.subr.mxu0 0.0
    %255 = vmatpush1.msra.mxu0 0.0
    %256 = vmatprep.subr.mxu0 0.0
    %257 = vmatpush1.msra.mxu0 0.0
    %258 = vmatprep.subr.mxu0 0.0
    %259 = vmatpush1.msra.mxu0 0.0
    %260 = vmatprep.subr.mxu0 0.0
    %261 = vmatpush1.msra.mxu0 0.0
    %262 = vmatprep.subr.mxu0 0.0
    %263 = vmatpush1.msra.mxu0 0.0
    %264 = vmatprep.subr.mxu0 0.0
    %265 = vmatpush1.msra.mxu0 0.0
    %266 = vmatprep.subr.mxu0 0.0
    %267 = vmatpush1.msra.mxu0 0.0
    %268 = vmatprep.subr.mxu0 0.0
    %269 = vmatpush1.msra.mxu0 0.0
    %270 = vmatprep.subr.mxu0 0.0
    %271 = vmatpush1.msra.mxu0 0.0
    %272 = vmatprep.subr.mxu0 0.0
    %273 = vmatpush1.msra.mxu0 %v27
    %274 = vmatprep.subr.mxu0 0.0
    %275 = vmatpush1.msra.mxu0 %v26
    %276 = vmatprep.subr.mxu0 0.0
    %277 = vmatpush1.msra.mxu0 %v25
    %278 = vmatprep.subr.mxu0 0.0
    %279 = vmatpush1.msra.mxu0 %v24
    %280 = vmatprep.subr.mxu0 0.0
    %281 = vmatpush2.msra.mxu0 0.0
    %282 = vmatprep.subr.mxu0 0.0
    %283 = vmatpush2.msra.mxu0 0.0
    %284 = vmatprep.subr.mxu0 0.0
    %285 = vmatpush2.msra.mxu0 0.0
    %286 = vmatprep.subr.mxu0 0.0
    %287 = vmatpush2.msra.mxu0 0.0
    %288 = vmatprep.subr.mxu0 0.0
    %289 = vmatpush2.msra.mxu0 0.0
    %290 = vmatprep.subr.mxu0 0.0
    %291 = vmatpush2.msra.mxu0 0.0
    %292 = vmatprep.subr.mxu0 0.0
    %293 = vmatpush2.msra.mxu0 0.0
    %294 = vmatprep.subr.mxu0 0.0
    %295 = vmatpush2.msra.mxu0 0.0
    %296 = vmatprep.subr.mxu0 0.0
    %297 = vmatpush2.msra.mxu0 0.0
    %298 = vmatprep.subr.mxu0 0.0
    %299 = vmatpush2.msra.mxu0 0.0
    %300 = vmatprep.subr.mxu0 0.0
    %301 = vmatpush2.msra.mxu0 0.0
    %302 = vmatprep.subr.mxu0 0.0
    %303 = vmatpush2.msra.mxu0 0.0
    %304 = vmatprep.subr.mxu0 0.0
    %305 = vmatpush2.msra.mxu0 0.0
    %306 = vmatprep.subr.mxu0 0.0
    %307 = vmatpush2.msra.mxu0 0.0
    %308 = vmatprep.subr.mxu0 0.0
    %309 = vmatpush2.msra.mxu0 0.0
    %310 = vmatprep.subr.mxu0 0.0
    %311 = vmatpush2.msra.mxu0 0.0
    %312 = vmatprep.mubr.f32.mxu0 0.0
    %313 = vmatmul.mubr.f32.gmra.mxu0 %v246
    %v314 = vpop.f32.mrf.mxu0
    %v315 = vadd.f32 0.0, %v314
    %v316 = vpop.f32.mrf.mxu0
    %317 = vdwg.mxu0
    %v318 = vadd.f32 %v245, %v315
    %v319 = vxor.u32 %v318, 2147483648
    %v320 = vmul.f32 %v319, 1.442695
    %v321 = vpow.pop %v320
    %v322 = vadd.f32 %v321, 1.0
    %v323 = vrcp.pop %v322
    %v324 = vmul.f32 1.0, %v323
    %v325 = vmul.f32 %v324, 2.0
    %v326 = vsub.f32 %v325, 1.0
    %v327 = vmul.f32 %v324, %v233
    %329 = vrot.lane.b32.xlu0 %v326, 64
    %v330 = vpop.permute.xlu0 %329
    %v332 = vmul.f32 %v324, %v330
    %334 = vrot.lane.b32.xlu0 %v332, 32
    %v335 = vpop.permute.xlu0 %334
    %v337 = vadd.f32 %v327, %v335
    %v338 = vtanh.pop %v337
    %340 = vrot.lane.b32.xlu0 %v338, 64
    %v341 = vpop.permute.xlu0 %340
    %v343 = vmul.f32 %v324, %v341
    %345 = vrot.lane.b32.xlu0 %v343, 32
    %v346 = vpop.permute.xlu0 %345
    %348 = vst.msk [vmem:[#allocation3 + $0x2] sm:$0x1] %vm139, %v346
    %v349 = vld [vmem:[%s0 + $0x3] sm:$0x1]
    %v350 = vsel %vm31, %v346, 0
    %352 = vmatprep.subr.mxu0 0.0
    %353 = vmatpush1.msra.mxu0 0.0
    %354 = vmatprep.subr.mxu0 0.0
    %355 = vmatpush1.msra.mxu0 0.0
    %356 = vmatprep.subr.mxu0 0.0
    %357 = vmatpush1.msra.mxu0 0.0
    %358 = vmatprep.subr.mxu0 0.0
    %359 = vmatpush1.msra.mxu0 0.0
    %360 = vmatprep.subr.mxu0 0.0
    %361 = vmatpush1.msra.mxu0 0.0
    %362 = vmatprep.subr.mxu0 0.0
    %363 = vmatpush1.msra.mxu0 0.0
    %364 = vmatprep.subr.mxu0 0.0
    %365 = vmatpush1.msra.mxu0 0.0
    %366 = vmatprep.subr.mxu0 0.0
    %367 = vmatpush1.msra.mxu0 0.0
    %368 = vmatprep.subr.mxu0 0.0
    %369 = vmatpush1.msra.mxu0 0.0
    %370 = vmatprep.subr.mxu0 0.0
    %371 = vmatpush1.msra.mxu0 0.0
    %372 = vmatprep.subr.mxu0 0.0
    %373 = vmatpush1.msra.mxu0 0.0
    %374 = vmatprep.subr.mxu0 0.0
    %375 = vmatpush1.msra.mxu0 0.0
    %376 = vmatprep.subr.mxu0 0.0
    %377 = vmatpush1.msra.mxu0 %v27
    %378 = vmatprep.subr.mxu0 0.0
    %379 = vmatpush1.msra.mxu0 %v26
    %380 = vmatprep.subr.mxu0 0.0
    %381 = vmatpush1.msra.mxu0 %v25
    %382 = vmatprep.subr.mxu0 0.0
    %383 = vmatpush1.msra.mxu0 %v24
    %384 = vmatprep.subr.mxu0 0.0
    %385 = vmatpush2.msra.mxu0 0.0
    %386 = vmatprep.subr.mxu0 0.0
    %387 = vmatpush2.msra.mxu0 0.0
    %388 = vmatprep.subr.mxu0 0.0
    %389 = vmatpush2.msra.mxu0 0.0
    %390 = vmatprep.subr.mxu0 0.0
    %391 = vmatpush2.msra.mxu0 0.0
    %392 = vmatprep.subr.mxu0 0.0
    %393 = vmatpush2.msra.mxu0 0.0
    %394 = vmatprep.subr.mxu0 0.0
    %395 = vmatpush2.msra.mxu0 0.0
    %396 = vmatprep.subr.mxu0 0.0
    %397 = vmatpush2.msra.mxu0 0.0
    %398 = vmatprep.subr.mxu0 0.0
    %399 = vmatpush2.msra.mxu0 0.0
    %400 = vmatprep.subr.mxu0 0.0
    %401 = vmatpush2.msra.mxu0 0.0
    %402 = vmatprep.subr.mxu0 0.0
    %403 = vmatpush2.msra.mxu0 0.0
    %404 = vmatprep.subr.mxu0 0.0
    %405 = vmatpush2.msra.mxu0 0.0
    %406 = vmatprep.subr.mxu0 0.0
    %407 = vmatpush2.msra.mxu0 0.0
    %408 = vmatprep.subr.mxu0 0.0
    %409 = vmatpush2.msra.mxu0 0.0
    %410 = vmatprep.subr.mxu0 0.0
    %411 = vmatpush2.msra.mxu0 0.0
    %412 = vmatprep.subr.mxu0 0.0
    %413 = vmatpush2.msra.mxu0 0.0
    %414 = vmatprep.subr.mxu0 0.0
    %415 = vmatpush2.msra.mxu0 0.0
    %416 = vmatprep.mubr.f32.mxu0 0.0
    %417 = vmatmul.mubr.f32.gmra.mxu0 %v350
    %v418 = vpop.f32.mrf.mxu0
    %v419 = vadd.f32 0.0, %v418
    %v420 = vpop.f32.mrf.mxu0
    %421 = vdwg.mxu0
    %v422 = vadd.f32 %v349, %v419
    %v423 = vxor.u32 %v422, 2147483648
    %v424 = vmul.f32 %v423, 1.442695
    %v425 = vpow.pop %v424
    %v426 = vadd.f32 %v425, 1.0
    %v427 = vrcp.pop %v426
    %v428 = vmul.f32 1.0, %v427
    %v429 = vmul.f32 %v428, 2.0
    %v430 = vsub.f32 %v429, 1.0
    %v431 = vmul.f32 %v428, %v337
    %433 = vrot.lane.b32.xlu0 %v430, 64
    %v434 = vpop.permute.xlu0 %433
    %v436 = vmul.f32 %v428, %v434
    %438 = vrot.lane.b32.xlu0 %v436, 32
    %v439 = vpop.permute.xlu0 %438
    %v441 = vadd.f32 %v431, %v439
    %v442 = vtanh.pop %v441
    %444 = vrot.lane.b32.xlu0 %v442, 64
    %v445 = vpop.permute.xlu0 %444
    %v447 = vmul.f32 %v428, %v445
    %449 = vrot.lane.b32.xlu0 %v447, 32
    %v450 = vpop.permute.xlu0 %449
    %452 = vst.msk [vmem:[#allocation3 + $0x3] sm:$0x1] %vm139, %v450
    %v453 = vld [vmem:[%s0 + $0x4] sm:$0x1]
    %v454 = vsel %vm31, %v450, 0
    %456 = vmatprep.subr.mxu0 0.0
    %457 = vmatpush1.msra.mxu0 0.0
    %458 = vmatprep.subr.mxu0 0.0
    %459 = vmatpush1.msra.mxu0 0.0
    %460 = vmatprep.subr.mxu0 0.0
    %461 = vmatpush1.msra.mxu0 0.0
    %462 = vmatprep.subr.mxu0 0.0
    %463 = vmatpush1.msra.mxu0 0.0
    %464 = vmatprep.subr.mxu0 0.0
    %465 = vmatpush1.msra.mxu0 0.0
    %466 = vmatprep.subr.mxu0 0.0
    %467 = vmatpush1.msra.mxu0 0.0
    %468 = vmatprep.subr.mxu0 0.0
    %469 = vmatpush1.msra.mxu0 0.0
    %470 = vmatprep.subr.mxu0 0.0
    %471 = vmatpush1.msra.mxu0 0.0
    %472 = vmatprep.subr.mxu0 0.0
    %473 = vmatpush1.msra.mxu0 0.0
    %474 = vmatprep.subr.mxu0 0.0
    %475 = vmatpush1.msra.mxu0 0.0
    %476 = vmatprep.subr.mxu0 0.0
    %477 = vmatpush1.msra.mxu0 0.0
    %478 = vmatprep.subr.mxu0 0.0
    %479 = vmatpush1.msra.mxu0 0.0
    %480 = vmatprep.subr.mxu0 0.0
    %481 = vmatpush1.msra.mxu0 %v27
    %482 = vmatprep.subr.mxu0 0.0
    %483 = vmatpush1.msra.mxu0 %v26
    %484 = vmatprep.subr.mxu0 0.0
    %485 = vmatpush1.msra.mxu0 %v25
    %486 = vmatprep.subr.mxu0 0.0
    %487 = vmatpush1.msra.mxu0 %v24
    %488 = vmatprep.subr.mxu0 0.0
    %489 = vmatpush2.msra.mxu0 0.0
    %490 = vmatprep.subr.mxu0 0.0
    %491 = vmatpush2.msra.mxu0 0.0
    %492 = vmatprep.subr.mxu0 0.0
    %493 = vmatpush2.msra.mxu0 0.0
    %494 = vmatprep.subr.mxu0 0.0
    %495 = vmatpush2.msra.mxu0 0.0
    %496 = vmatprep.subr.mxu0 0.0
    %497 = vmatpush2.msra.mxu0 0.0
    %498 = vmatprep.subr.mxu0 0.0
    %499 = vmatpush2.msra.mxu0 0.0
    %500 = vmatprep.subr.mxu0 0.0
    %501 = vmatpush2.msra.mxu0 0.0
    %502 = vmatprep.subr.mxu0 0.0
    %503 = vmatpush2.msra.mxu0 0.0
    %504 = vmatprep.subr.mxu0 0.0
    %505 = vmatpush2.msra.mxu0 0.0
    %506 = vmatprep.subr.mxu0 0.0
    %507 = vmatpush2.msra.mxu0 0.0
    %508 = vmatprep.subr.mxu0 0.0
    %509 = vmatpush2.msra.mxu0 0.0
    %510 = vmatprep.subr.mxu0 0.0
    %511 = vmatpush2.msra.mxu0 0.0
    %512 = vmatprep.subr.mxu0 0.0
    %513 = vmatpush2.msra.mxu0 0.0
    %514 = vmatprep.subr.mxu0 0.0
    %515 = vmatpush2.msra.mxu0 0.0
    %516 = vmatprep.subr.mxu0 0.0
    %517 = vmatpush2.msra.mxu0 0.0
    %518 = vmatprep.subr.mxu0 0.0
    %519 = vmatpush2.msra.mxu0 0.0
    %520 = vmatprep.mubr.f32.mxu0 0.0
    %521 = vmatmul.mubr.f32.gmra.mxu0 %v454
    %v522 = vpop.f32.mrf.mxu0
    %v523 = vadd.f32 0.0, %v522
    %v524 = vpop.f32.mrf.mxu0
    %525 = vdwg.mxu0
    %v526 = vadd.f32 %v453, %v523
    %v527 = vxor.u32 %v526, 2147483648
    %v528 = vmul.f32 %v527, 1.442695
    %v529 = vpow.pop %v528
    %v530 = vadd.f32 %v529, 1.0
    %v531 = vrcp.pop %v530
    %v532 = vmul.f32 1.0, %v531
    %v533 = vmul.f32 %v532, 2.0
    %v534 = vsub.f32 %v533, 1.0
    %v535 = vmul.f32 %v532, %v441
    %537 = vrot.lane.b32.xlu0 %v534, 64
    %v538 = vpop.permute.xlu0 %537
    %v540 = vmul.f32 %v532, %v538
    %542 = vrot.lane.b32.xlu0 %v540, 32
    %v543 = vpop.permute.xlu0 %542
    %v545 = vadd.f32 %v535, %v543
    %v546 = vtanh.pop %v545
    %548 = vrot.lane.b32.xlu0 %v546, 64
    %v549 = vpop.permute.xlu0 %548
    %v551 = vmul.f32 %v532, %v549
    %553 = vrot.lane.b32.xlu0 %v551, 32
    %v554 = vpop.permute.xlu0 %553
    %556 = vst.msk [vmem:[#allocation3 + $0x4] sm:$0x1] %vm139, %v554
    %v557 = vld [vmem:[%s0 + $0x5] sm:$0x1]
    %v558 = vsel %vm31, %v554, 0
    %560 = vmatprep.subr.mxu0 0.0
    %561 = vmatpush1.msra.mxu0 0.0
    %562 = vmatprep.subr.mxu0 0.0
    %563 = vmatpush1.msra.mxu0 0.0
    %564 = vmatprep.subr.mxu0 0.0
    %565 = vmatpush1.msra.mxu0 0.0
    %566 = vmatprep.subr.mxu0 0.0
    %567 = vmatpush1.msra.mxu0 0.0
    %568 = vmatprep.subr.mxu0 0.0
    %569 = vmatpush1.msra.mxu0 0.0
    %570 = vmatprep.subr.mxu0 0.0
    %571 = vmatpush1.msra.mxu0 0.0
    %572 = vmatprep.subr.mxu0 0.0
    %573 = vmatpush1.msra.mxu0 0.0
    %574 = vmatprep.subr.mxu0 0.0
    %575 = vmatpush1.msra.mxu0 0.0
    %576 = vmatprep.subr.mxu0 0.0
    %577 = vmatpush1.msra.mxu0 0.0
    %578 = vmatprep.subr.mxu0 0.0
    %579 = vmatpush1.msra.mxu0 0.0
    %580 = vmatprep.subr.mxu0 0.0
    %581 = vmatpush1.msra.mxu0 0.0
    %582 = vmatprep.subr.mxu0 0.0
    %583 = vmatpush1.msra.mxu0 0.0
    %584 = vmatprep.subr.mxu0 0.0
    %585 = vmatpush1.msra.mxu0 %v27
    %586 = vmatprep.subr.mxu0 0.0
    %587 = vmatpush1.msra.mxu0 %v26
    %588 = vmatprep.subr.mxu0 0.0
    %589 = vmatpush1.msra.mxu0 %v25
    %590 = vmatprep.subr.mxu0 0.0
    %591 = vmatpush1.msra.mxu0 %v24
    %592 = vmatprep.subr.mxu0 0.0
    %593 = vmatpush2.msra.mxu0 0.0
    %594 = vmatprep.subr.mxu0 0.0
    %595 = vmatpush2.msra.mxu0 0.0
    %596 = vmatprep.subr.mxu0 0.0
    %597 = vmatpush2.msra.mxu0 0.0
    %598 = vmatprep.subr.mxu0 0.0
    %599 = vmatpush2.msra.mxu0 0.0
    %600 = vmatprep.subr.mxu0 0.0
    %601 = vmatpush2.msra.mxu0 0.0
    %602 = vmatprep.subr.mxu0 0.0
    %603 = vmatpush2.msra.mxu0 0.0
    %604 = vmatprep.subr.mxu0 0.0
    %605 = vmatpush2.msra.mxu0 0.0
    %606 = vmatprep.subr.mxu0 0.0
    %607 = vmatpush2.msra.mxu0 0.0
    %608 = vmatprep.subr.mxu0 0.0
    %609 = vmatpush2.msra.mxu0 0.0
    %610 = vmatprep.subr.mxu0 0.0
    %611 = vmatpush2.msra.mxu0 0.0
    %612 = vmatprep.subr.mxu0 0.0
    %613 = vmatpush2.msra.mxu0 0.0
    %614 = vmatprep.subr.mxu0 0.0
    %615 = vmatpush2.msra.mxu0 0.0
    %616 = vmatprep.subr.mxu0 0.0
    %617 = vmatpush2.msra.mxu0 0.0
    %618 = vmatprep.subr.mxu0 0.0
    %619 = vmatpush2.msra.mxu0 0.0
    %620 = vmatprep.subr.mxu0 0.0
    %621 = vmatpush2.msra.mxu0 0.0
    %622 = vmatprep.subr.mxu0 0.0
    %623 = vmatpush2.msra.mxu0 0.0
    %624 = vmatprep.mubr.f32.mxu0 0.0
    %625 = vmatmul.mubr.f32.gmra.mxu0 %v558
    %v626 = vpop.f32.mrf.mxu0
    %v627 = vadd.f32 0.0, %v626
    %v628 = vpop.f32.mrf.mxu0
    %629 = vdwg.mxu0
    %v630 = vadd.f32 %v557, %v627
    %v631 = vxor.u32 %v630, 2147483648
    %v632 = vmul.f32 %v631, 1.442695
    %v633 = vpow.pop %v632
    %v634 = vadd.f32 %v633, 1.0
    %v635 = vrcp.pop %v634
    %v636 = vmul.f32 1.0, %v635
    %v637 = vmul.f32 %v636, 2.0
    %v638 = vsub.f32 %v637, 1.0
    %v639 = vmul.f32 %v636, %v545
    %641 = vrot.lane.b32.xlu0 %v638, 64
    %v642 = vpop.permute.xlu0 %641
    %v644 = vmul.f32 %v636, %v642
    %646 = vrot.lane.b32.xlu0 %v644, 32
    %v647 = vpop.permute.xlu0 %646
    %v649 = vadd.f32 %v639, %v647
    %v650 = vtanh.pop %v649
    %652 = vrot.lane.b32.xlu0 %v650, 64
    %v653 = vpop.permute.xlu0 %652
    %v655 = vmul.f32 %v636, %v653
    %657 = vrot.lane.b32.xlu0 %v655, 32
    %v658 = vpop.permute.xlu0 %657
    %660 = vst.msk [vmem:[#allocation3 + $0x5] sm:$0x1] %vm139, %v658
    %v661 = vld [vmem:[%s0 + $0x6] sm:$0x1]
    %v662 = vsel %vm31, %v658, 0
    %664 = vmatprep.subr.mxu0 0.0
    %665 = vmatpush1.msra.mxu0 0.0
    %666 = vmatprep.subr.mxu0 0.0
    %667 = vmatpush1.msra.mxu0 0.0
    %668 = vmatprep.subr.mxu0 0.0
    %669 = vmatpush1.msra.mxu0 0.0
    %670 = vmatprep.subr.mxu0 0.0
    %671 = vmatpush1.msra.mxu0 0.0
    %672 = vmatprep.subr.mxu0 0.0
    %673 = vmatpush1.msra.mxu0 0.0
    %674 = vmatprep.subr.mxu0 0.0
    %675 = vmatpush1.msra.mxu0 0.0
    %676 = vmatprep.subr.mxu0 0.0
    %677 = vmatpush1.msra.mxu0 0.0
    %678 = vmatprep.subr.mxu0 0.0
    %679 = vmatpush1.msra.mxu0 0.0
    %680 = vmatprep.subr.mxu0 0.0
    %681 = vmatpush1.msra.mxu0 0.0
    %682 = vmatprep.subr.mxu0 0.0
    %683 = vmatpush1.msra.mxu0 0.0
    %684 = vmatprep.subr.mxu0 0.0
    %685 = vmatpush1.msra.mxu0 0.0
    %686 = vmatprep.subr.mxu0 0.0
    %687 = vmatpush1.msra.mxu0 0.0
    %688 = vmatprep.subr.mxu0 0.0
    %689 = vmatpush1.msra.mxu0 %v27
    %690 = vmatprep.subr.mxu0 0.0
    %691 = vmatpush1.msra.mxu0 %v26
    %692 = vmatprep.subr.mxu0 0.0
    %693 = vmatpush1.msra.mxu0 %v25
    %694 = vmatprep.subr.mxu0 0.0
    %695 = vmatpush1.msra.mxu0 %v24
    %696 = vmatprep.subr.mxu0 0.0
    %697 = vmatpush2.msra.mxu0 0.0
    %698 = vmatprep.subr.mxu0 0.0
    %699 = vmatpush2.msra.mxu0 0.0
    %700 = vmatprep.subr.mxu0 0.0
    %701 = vmatpush2.msra.mxu0 0.0
    %702 = vmatprep.subr.mxu0 0.0
    %703 = vmatpush2.msra.mxu0 0.0
    %704 = vmatprep.subr.mxu0 0.0
    %705 = vmatpush2.msra.mxu0 0.0
    %706 = vmatprep.subr.mxu0 0.0
    %707 = vmatpush2.msra.mxu0 0.0
    %708 = vmatprep.subr.mxu0 0.0
    %709 = vmatpush2.msra.mxu0 0.0
    %710 = vmatprep.subr.mxu0 0.0
    %711 = vmatpush2.msra.mxu0 0.0
    %712 = vmatprep.subr.mxu0 0.0
    %713 = vmatpush2.msra.mxu0 0.0
    %714 = vmatprep.subr.mxu0 0.0
    %715 = vmatpush2.msra.mxu0 0.0
    %716 = vmatprep.subr.mxu0 0.0
    %717 = vmatpush2.msra.mxu0 0.0
    %718 = vmatprep.subr.mxu0 0.0
    %719 = vmatpush2.msra.mxu0 0.0
    %720 = vmatprep.subr.mxu0 0.0
    %721 = vmatpush2.msra.mxu0 0.0
    %722 = vmatprep.subr.mxu0 0.0
    %723 = vmatpush2.msra.mxu0 0.0
    %724 = vmatprep.subr.mxu0 0.0
    %725 = vmatpush2.msra.mxu0 0.0
    %726 = vmatprep.subr.mxu0 0.0
    %727 = vmatpush2.msra.mxu0 0.0
    %728 = vmatprep.mubr.f32.mxu0 0.0
    %729 = vmatmul.mubr.f32.gmra.mxu0 %v662
    %v730 = vpop.f32.mrf.mxu0
    %v731 = vadd.f32 0.0, %v730
    %v732 = vpop.f32.mrf.mxu0
    %733 = vdwg.mxu0
    %v734 = vadd.f32 %v661, %v731
    %v735 = vxor.u32 %v734, 2147483648
    %v736 = vmul.f32 %v735, 1.442695
    %v737 = vpow.pop %v736
    %v738 = vadd.f32 %v737, 1.0
    %v739 = vrcp.pop %v738
    %v740 = vmul.f32 1.0, %v739
    %v741 = vmul.f32 %v740, 2.0
    %v742 = vsub.f32 %v741, 1.0
    %v743 = vmul.f32 %v740, %v649
    %745 = vrot.lane.b32.xlu0 %v742, 64
    %v746 = vpop.permute.xlu0 %745
    %v748 = vmul.f32 %v740, %v746
    %750 = vrot.lane.b32.xlu0 %v748, 32
    %v751 = vpop.permute.xlu0 %750
    %v753 = vadd.f32 %v743, %v751
    %v754 = vtanh.pop %v753
    %756 = vrot.lane.b32.xlu0 %v754, 64
    %v757 = vpop.permute.xlu0 %756
    %v759 = vmul.f32 %v740, %v757
    %761 = vrot.lane.b32.xlu0 %v759, 32
    %v762 = vpop.permute.xlu0 %761
    %764 = vst.msk [vmem:[#allocation3 + $0x6] sm:$0x1] %vm139, %v762
    %v765 = vld [vmem:[%s0 + $0x7] sm:$0x1]
    %v766 = vsel %vm31, %v762, 0
    %768 = vmatprep.subr.mxu0 0.0
    %769 = vmatpush1.msra.mxu0 0.0
    %770 = vmatprep.subr.mxu0 0.0
    %771 = vmatpush1.msra.mxu0 0.0
    %772 = vmatprep.subr.mxu0 0.0
    %773 = vmatpush1.msra.mxu0 0.0
    %774 = vmatprep.subr.mxu0 0.0
    %775 = vmatpush1.msra.mxu0 0.0
    %776 = vmatprep.subr.mxu0 0.0
    %777 = vmatpush1.msra.mxu0 0.0
    %778 = vmatprep.subr.mxu0 0.0
    %779 = vmatpush1.msra.mxu0 0.0
    %780 = vmatprep.subr.mxu0 0.0
    %781 = vmatpush1.msra.mxu0 0.0
    %782 = vmatprep.subr.mxu0 0.0
    %783 = vmatpush1.msra.mxu0 0.0
    %784 = vmatprep.subr.mxu0 0.0
    %785 = vmatpush1.msra.mxu0 0.0
    %786 = vmatprep.subr.mxu0 0.0
    %787 = vmatpush1.msra.mxu0 0.0
    %788 = vmatprep.subr.mxu0 0.0
    %789 = vmatpush1.msra.mxu0 0.0
    %790 = vmatprep.subr.mxu0 0.0
    %791 = vmatpush1.msra.mxu0 0.0
    %792 = vmatprep.subr.mxu0 0.0
    %793 = vmatpush1.msra.mxu0 %v27
    %794 = vmatprep.subr.mxu0 0.0
    %795 = vmatpush1.msra.mxu0 %v26
    %796 = vmatprep.subr.mxu0 0.0
    %797 = vmatpush1.msra.mxu0 %v25
    %798 = vmatprep.subr.mxu0 0.0
    %799 = vmatpush1.msra.mxu0 %v24
    %800 = vmatprep.subr.mxu0 0.0
    %801 = vmatpush2.msra.mxu0 0.0
    %802 = vmatprep.subr.mxu0 0.0
    %803 = vmatpush2.msra.mxu0 0.0
    %804 = vmatprep.subr.mxu0 0.0
    %805 = vmatpush2.msra.mxu0 0.0
    %806 = vmatprep.subr.mxu0 0.0
    %807 = vmatpush2.msra.mxu0 0.0
    %808 = vmatprep.subr.mxu0 0.0
    %809 = vmatpush2.msra.mxu0 0.0
    %810 = vmatprep.subr.mxu0 0.0
    %811 = vmatpush2.msra.mxu0 0.0
    %812 = vmatprep.subr.mxu0 0.0
    %813 = vmatpush2.msra.mxu0 0.0
    %814 = vmatprep.subr.mxu0 0.0
    %815 = vmatpush2.msra.mxu0 0.0
    %816 = vmatprep.subr.mxu0 0.0
    %817 = vmatpush2.msra.mxu0 0.0
    %818 = vmatprep.subr.mxu0 0.0
    %819 = vmatpush2.msra.mxu0 0.0
    %820 = vmatprep.subr.mxu0 0.0
    %821 = vmatpush2.msra.mxu0 0.0
    %822 = vmatprep.subr.mxu0 0.0
    %823 = vmatpush2.msra.mxu0 0.0
    %824 = vmatprep.subr.mxu0 0.0
    %825 = vmatpush2.msra.mxu0 0.0
    %826 = vmatprep.subr.mxu0 0.0
    %827 = vmatpush2.msra.mxu0 0.0
    %828 = vmatprep.subr.mxu0 0.0
    %829 = vmatpush2.msra.mxu0 0.0
    %830 = vmatprep.subr.mxu0 0.0
    %831 = vmatpush2.msra.mxu0 0.0
    %832 = vmatprep.mubr.f32.mxu0 0.0
    %833 = vmatmul.mubr.f32.gmra.mxu0 %v766
    %v834 = vpop.f32.mrf.mxu0
    %v835 = vadd.f32 0.0, %v834
    %v836 = vpop.f32.mrf.mxu0
    %837 = vdwg.mxu0
    %v838 = vadd.f32 %v765, %v835
    %v839 = vxor.u32 %v838, 2147483648
    %v840 = vmul.f32 %v839, 1.442695
    %v841 = vpow.pop %v840
    %v842 = vadd.f32 %v841, 1.0
    %v843 = vrcp.pop %v842
    %v844 = vmul.f32 1.0, %v843
    %v845 = vmul.f32 %v844, 2.0
    %v846 = vsub.f32 %v845, 1.0
    %v847 = vmul.f32 %v844, %v753
    %849 = vrot.lane.b32.xlu0 %v846, 64
    %v850 = vpop.permute.xlu0 %849
    %v852 = vmul.f32 %v844, %v850
    %854 = vrot.lane.b32.xlu0 %v852, 32
    %v855 = vpop.permute.xlu0 %854
    %v857 = vadd.f32 %v847, %v855
    %v858 = vtanh.pop %v857
    %860 = vrot.lane.b32.xlu0 %v858, 64
    %v861 = vpop.permute.xlu0 %860
    %v863 = vmul.f32 %v844, %v861
    %865 = vrot.lane.b32.xlu0 %v863, 32
    %v866 = vpop.permute.xlu0 %865
    %868 = vst.msk [vmem:[#allocation3 + $0x7] sm:$0x1] %vm139, %v866
    %869 = vst.msk [vmem:[#allocation2] sm:$0x1] %vm139, %v866
    %871 = vrot.lane.b32.xlu0 %v857, 96
    %v872 = vpop.permute.xlu0 %871
    %874 = vst.msk [vmem:[#allocation2 + $0x1] sm:$0x1] %vm139, %v872
    %v875 = vld [vmem:[#allocation3] sm:$0xff]
    %v876 = vld [vmem:[%s2] sm:$0xff]
    %v877 = vld [vmem:[%s2 + $0x8] sm:$0xff]
    %v878 = vld [vmem:[%s2 + $0x10] sm:$0xff]
    %v879 = vld [vmem:[%s2 + $0x18] sm:$0xff]
    %v880 = vld [vmem:[%s3] sm:$0x1]
    %v882 = vlaneseq
    %v883 = vshrl.u32 %v882, 7
    %v884 = vsub.s32 0, %v883
    %v885 = vrot.slane %v880, %v884
    %v888 = vsel %vm31, %v875, 0
    %890 = vmatprep.subr.mxu0 0.0
    %891 = vmatpush1.msra.mxu0 0.0
    %892 = vmatprep.subr.mxu0 0.0
    %893 = vmatpush1.msra.mxu0 0.0
    %894 = vmatprep.subr.mxu0 0.0
    %895 = vmatpush1.msra.mxu0 0.0
    %896 = vmatprep.subr.mxu0 0.0
    %897 = vmatpush1.msra.mxu0 0.0
    %898 = vmatprep.subr.mxu0 0.0
    %899 = vmatpush1.msra.mxu0 0.0
    %900 = vmatprep.subr.mxu0 0.0
    %901 = vmatpush1.msra.mxu0 0.0
    %902 = vmatprep.subr.mxu0 0.0
    %903 = vmatpush1.msra.mxu0 0.0
    %904 = vmatprep.subr.mxu0 0.0
    %905 = vmatpush1.msra.mxu0 0.0
    %906 = vmatprep.subr.mxu0 0.0
    %907 = vmatpush1.msra.mxu0 0.0
    %908 = vmatprep.subr.mxu0 0.0
    %909 = vmatpush1.msra.mxu0 0.0
    %910 = vmatprep.subr.mxu0 0.0
    %911 = vmatpush1.msra.mxu0 0.0
    %912 = vmatprep.subr.mxu0 0.0
    %913 = vmatpush1.msra.mxu0 0.0
    %914 = vmatprep.subr.mxu0 0.0
    %915 = vmatpush1.msra.mxu0 %v879
    %916 = vmatprep.subr.mxu0 0.0
    %917 = vmatpush1.msra.mxu0 %v878
    %918 = vmatprep.subr.mxu0 0.0
    %919 = vmatpush1.msra.mxu0 %v877
    %920 = vmatprep.subr.mxu0 0.0
    %921 = vmatpush1.msra.mxu0 %v876
    %922 = vmatprep.subr.mxu0 0.0
    %923 = vmatpush2.msra.mxu0 0.0
    %924 = vmatprep.subr.mxu0 0.0
    %925 = vmatpush2.msra.mxu0 0.0
    %926 = vmatprep.subr.mxu0 0.0
    %927 = vmatpush2.msra.mxu0 0.0
    %928 = vmatprep.subr.mxu0 0.0
    %929 = vmatpush2.msra.mxu0 0.0
    %930 = vmatprep.subr.mxu0 0.0
    %931 = vmatpush2.msra.mxu0 0.0
    %932 = vmatprep.subr.mxu0 0.0
    %933 = vmatpush2.msra.mxu0 0.0
    %934 = vmatprep.subr.mxu0 0.0
    %935 = vmatpush2.msra.mxu0 0.0
    %936 = vmatprep.subr.mxu0 0.0
    %937 = vmatpush2.msra.mxu0 0.0
    %938 = vmatprep.subr.mxu0 0.0
    %939 = vmatpush2.msra.mxu0 0.0
    %940 = vmatprep.subr.mxu0 0.0
    %941 = vmatpush2.msra.mxu0 0.0
    %942 = vmatprep.subr.mxu0 0.0
    %943 = vmatpush2.msra.mxu0 0.0
    %944 = vmatprep.subr.mxu0 0.0
    %945 = vmatpush2.msra.mxu0 0.0
    %946 = vmatprep.subr.mxu0 0.0
    %947 = vmatpush2.msra.mxu0 0.0
    %948 = vmatprep.subr.mxu0 0.0
    %949 = vmatpush2.msra.mxu0 0.0
    %950 = vmatprep.subr.mxu0 0.0
    %951 = vmatpush2.msra.mxu0 0.0
    %952 = vmatprep.subr.mxu0 0.0
    %953 = vmatpush2.msra.mxu0 0.0
    %954 = vmatprep.mubr.f32.mxu0 0.0
    %955 = vmatmul.mubr.f32.gmra.mxu0 %v888
    %v956 = vpop.f32.mrf.mxu0
    %v957 = vadd.f32 %v885, %v956
    %v958 = vpop.f32.mrf.mxu0
    %959 = vdwg.mxu0
    %v960 = vsel %vm31, %v957, -inf
    %961 = vmax.xlane.f32.xlu0 %v960
    %v962 = vpop.xlane.xlu0 %961
    %v963 = vsub.f32 %v957, %v962
    %v964 = vmul.f32 %v963, 1.442695
    %v965 = vpow.pop %v964
    %v966 = vsel %vm31, %v965, 0.0
    %967 = vadd.xlane.f32.xlu0 %v966
    %v968 = vpop.xlane.xlu0 %967
    %v969 = vlog2.pop %v968
    %v970 = vmul.f32 %v969, 0.6931472
    %v971 = vadd.f32 %v962, %v970
    %v972 = vsub.f32 %v957, %v971
    %973 = vst [vmem:[#allocation4] sm:$0xff] %v972
    // Predicated region
    $region22: #{rnn_language_model_forward.1} parent=1 // pred_check
      _
    $region23: #{rnn_language_model_forward.1} parent=1 // pred_check_branch
      %975 = sbr.rel (0) target = $region25
    $region24: #{rnn_language_model_forward.1} parent=1 // pred_region
      %s977 = ssub.s32 128, 128
      %978 = vsyncadd [#allocation5], %s977
      %s980 = sshll.u32 [#allocation4], 4
      %s981 = int_to_ptr.vmem [resolvable:$true] %s980
      %983 = dma.vmem_to_hbm [thread:$0]  %s981, 128, %s4, [#allocation5]
    $region25: #{rnn_language_model_forward.1} parent=1 // pred_fallthru
      _
    // Predicated region
    $region26: #{rnn_language_model_forward.1} parent=1 // pred_check
      _
    $region27: #{rnn_language_model_forward.1} parent=1 // pred_check_branch
      %985 = sbr.rel (0) target = $region29
    $region28: #{rnn_language_model_forward.1} parent=1 // pred_region
      %986 = dma.done [#allocation5], 128
    $region29: #{rnn_language_model_forward.1} parent=1 // pred_fallthru
      _
    %987 = vsyncpa [#allocation5], 1

</llo_original>
